<compile_context>
chip_gen: v6e
topology: v6e:2x2x1
jax: 0.10.0
libtpu: 0.0.40
codegen_flags: <defaults>
</compile_context>

<pallas_src>
import jax
import jax.numpy as jnp
from jax.experimental import pallas as pl
from jax.experimental.pallas import tpu as pltpu


# ----------------------------------------------------------------------------- kernels
def _linear_single_kernel(x_ref, w_ref, b_ref, o_ref):
    # Whole problem in VMEM: one MXU pass, bias added inline, f32 output.
    o_ref[...] = (
        jnp.dot(x_ref[...], w_ref[...], preferred_element_type=jnp.float32)
        + b_ref[...]
    )


def _linear_tiled_kernel(x_ref, w_ref, b_ref, o_ref):
    k = pl.program_id(2)

    @pl.when(k == 0)
    def _init():
        # Seed the resident f32 output tile with the broadcast bias: no separate
        # accumulator scratch, no finalize copy, no zero-then-add.
        o_ref[...] = jnp.broadcast_to(b_ref[...], o_ref.shape)

    # x tile (tm, tk) bf16 @ W tile (tk, tn) bf16 — MXU-native layout, f32 accum
    # directly into the output tile (its block index ignores k, so it stays
    # resident in VMEM across the K axis).
    o_ref[...] += jnp.dot(x_ref[...], w_ref[...], preferred_element_type=jnp.float32)


# ----------------------------------------------------------------------------- helpers
def _round_up(v, m):
    return (v + m - 1) // m * m


def _largest_divisor_tile(dim_pad, align, cap):
    """Largest multiple of `align` that divides dim_pad and is <= cap."""
    best = align
    t = align
    limit = min(cap, dim_pad)
    while t <= limit:
        if dim_pad % t == 0:
            best = t
        t += align
    return best


def _tpu_config():
    kind = ""
    try:
        kind = jax.devices()[0].device_kind.lower()
    except Exception:
        pass
    if "v5" in kind:
        # v5e/v5p: 128 MiB VMEM; MXU is 4x128x128 so 128-wide N tiles already fill it.
        return dict(vmem_budget=96 << 20, tm_max=512, tn_max=512, tk_max=2048,
                    num_cores=1)
    if "v6" in kind:
        # v6e: 128 MiB VMEM, 2x256x256 MXU -> allow wide N / deep K tiles.
        return dict(vmem_budget=96 << 20, tm_max=512, tn_max=1024, tk_max=2048,
                    num_cores=1)
    # v7x (or unknown -> conservative): 64 MiB VMEM, 2 TensorCores.
    return dict(vmem_budget=40 << 20, tm_max=256, tn_max=512, tk_max=1024,
                num_cores=2)


def _select_tiles(m_pad, n_pad, k_pad, cfg):
    tm_cap, tn_cap, tk_cap = cfg["tm_max"], cfg["tn_max"], cfg["tk_max"]
    budget = cfg["vmem_budget"]

    def pick():
        tm = _largest_divisor_tile(m_pad, 16, tm_cap)
        tn = _largest_divisor_tile(n_pad, 128, tn_cap)
        tk = _largest_divisor_tile(k_pad, 128, tk_cap)
        return tm, tn, tk

    def footprint(tm, tn, tk):
        # double-buffered bf16 x/W tiles + f32 bias + double-buffered f32 out tile
        return 2 * (tm * tk + tk * tn) * 2 + 2 * (tn * 4) + 2 * (tm * tn * 4)

    tm, tn, tk = pick()
    for _ in range(16):
        if footprint(tm, tn, tk) <= budget // 2:
            break
        if tk > 128:
            tk_cap = max(128, tk // 2)
        elif tn > 128:
            tn_cap = max(128, tn // 2)
        elif tm > 16:
            tm_cap = max(16, tm // 2)
        else:
            break
        tm, tn, tk = pick()

    # v7x: make sure both TensorCores get work on the parallel (M, N) axes.
    if cfg["num_cores"] >= 2 and (m_pad // tm) * (n_pad // tn) < 2 and n_pad // 128 >= 2:
        tn = _largest_divisor_tile(n_pad, 128, max(128, n_pad // 2))

    return tm, tn, tk


# Whole-problem-in-VMEM threshold for the single-block fast path (comfortably
# under every generation's VMEM even if Pallas double-buffers the blocks).
_FAST_PATH_BYTES = 8 << 20


# ----------------------------------------------------------------------------- wrapper
def prepare_linear_params(weight, bias):
    """One-time preprocessing (cache and reuse across calls): transpose the
    nn.Linear weight (num_out, num_in) -> MXU-native (K, N), cast to bf16 and
    zero-pad K/N to 128-aligned; bias -> padded f32 row."""
    num_out, num_in = weight.shape
    assert bias.shape == (num_out,)
    k_pad = _round_up(num_in, 128)
    n_pad = _round_up(num_out, 128)
    w_p = jnp.zeros((k_pad, n_pad), jnp.bfloat16).at[:num_in, :num_out].set(
        weight.T.astype(jnp.bfloat16))
    b_p = jnp.zeros((1, n_pad), jnp.float32).at[0, :num_out].set(
        bias.astype(jnp.float32))
    return {"w_p": w_p, "b_p": b_p, "num_in": num_in, "num_out": num_out}


def linear_net_forward(x, params, *, force_tiled=False, tile_caps=None):
    """y = flatten(x) @ weight.T + bias (nn.Linear semantics; bf16-streamed
    operands, f32 accumulation)."""
    batch = x.shape[0]
    x2d = x.reshape(batch, -1)                       # x.view(B, -1)
    num_in, num_out = params["num_in"], params["num_out"]
    assert x2d.shape[1] == num_in
    w_p, b_p = params["w_p"], params["b_p"]
    k_pad, n_pad = w_p.shape

    cfg = dict(_tpu_config())
    if tile_caps:
        cfg.update(tile_caps)

    # Pad activations: M to 16 (bf16 sublane packing), K already handled by prepare.
    m_pad = _round_up(max(batch, 16), 16)
    x_bf = x2d.astype(jnp.bfloat16)
    if (m_pad, k_pad) != (batch, num_in):
        x_p = jnp.zeros((m_pad, k_pad), jnp.bfloat16).at[:batch, :num_in].set(x_bf)
    else:
        x_p = x_bf

    flops = 2 * m_pad * k_pad * n_pad
    total_bytes = x_p.size * 2 + w_p.size * 2 + b_p.size * 4 + m_pad * n_pad * 4

    # ---- single-block fast path: tiny problems skip the 3D grid entirely -------
    if (not force_tiled) and total_bytes <= _FAST_PATH_BYTES:
        y_p = pl.pallas_call(
            _linear_single_kernel,
            out_shape=jax.ShapeDtypeStruct((m_pad, n_pad), jnp.float32),
            grid_spec=pltpu.PrefetchScalarGridSpec(
                num_scalar_prefetch=0,
                grid=(1,),
                in_specs=[
                    pl.BlockSpec((m_pad, k_pad), lambda i: (0, 0)),
                    pl.BlockSpec((k_pad, n_pad), lambda i: (0, 0)),
                    pl.BlockSpec((1, n_pad), lambda i: (0, 0)),
                ],
                out_specs=pl.BlockSpec((m_pad, n_pad), lambda i: (0, 0)),
            ),
            compiler_params=pltpu.CompilerParams(
                dimension_semantics=("arbitrary",),
                vmem_limit_bytes=int(cfg["vmem_budget"]),
            ),
            cost_estimate=pl.CostEstimate(
                flops=int(flops), transcendentals=0,
                bytes_accessed=int(total_bytes)),
        )(x_p, w_p, b_p)
        return y_p[:batch, :num_out]

    # ---- tiled, pipelined path --------------------------------------------------
    tm, tn, tk = _select_tiles(m_pad, n_pad, k_pad, cfg)
    grid = (m_pad // tm, n_pad // tn, k_pad // tk)

    # Re-streaming-aware HBM traffic: x re-read per N tile, W per M tile.
    bytes_accessed = (x_p.size * 2 * grid[1]
                      + w_p.size * 2 * grid[0]
                      + b_p.size * 4 * grid[0]
                      + m_pad * n_pad * 4)

    y_p = pl.pallas_call(
        _linear_tiled_kernel,
        out_shape=jax.ShapeDtypeStruct((m_pad, n_pad), jnp.float32),
        grid_spec=pltpu.PrefetchScalarGridSpec(
            num_scalar_prefetch=0,
            grid=grid,
            in_specs=[
                pl.BlockSpec((tm, tk), lambda i, j, k: (i, k)),   # x tile
                pl.BlockSpec((tk, tn), lambda i, j, k: (k, j)),   # W tile, (K, N) layout
                pl.BlockSpec((1, tn), lambda i, j, k: (0, j)),    # bias tile
            ],
            out_specs=pl.BlockSpec((tm, tn), lambda i, j, k: (i, j)),
        ),
        compiler_params=pltpu.CompilerParams(
            dimension_semantics=("parallel", "parallel", "arbitrary"),
            vmem_limit_bytes=int(cfg["vmem_budget"]),
        ),
        cost_estimate=pl.CostEstimate(
            flops=int(flops), transcendentals=0,
            bytes_accessed=int(bytes_accessed)),
    )(x_p, w_p, b_p)

    return y_p[:batch, :num_out]


# ----------------------------------------------------------------------------- main
if __name__ == "__main__":
    # Small shapes consistent with the module: num_in = C*H*W, num_out = hidden.
    batch, channels, spatial = 2, 4, 16              # num_in = 4*16*16 = 1024
    num_in = channels * spatial * spatial
    num_out = 32

    key = jax.random.PRNGKey(0)
    kx, kw, kb = jax.random.split(key, 3)

    x = jax.random.normal(kx, (batch, channels, spatial, spatial), jnp.float32)
    # Deterministic nn.Linear-style init (uniform in +/- 1/sqrt(num_in)).
    bound = 1.0 / (num_in ** 0.5)
    weight = jax.random.uniform(kw, (num_out, num_in), jnp.float32, -bound, bound)
    bias = jax.random.uniform(kb, (num_out,), jnp.float32, -bound, bound)

    # Preprocess the weight ONCE (cached across calls in real use).
    params = prepare_linear_params(weight, bias)

    # Fast path (single-block kernel) — the default for these shipped shapes.
    y = jax.block_until_ready(linear_net_forward(x, params))
    assert y.shape == (batch, num_out)

    # Also exercise the tiled/pipelined path (force it, with a small K tile so the
    # K grid has >1 step and the resident-output accumulation is validated).
    y_tiled = jax.block_until_ready(
        linear_net_forward(x, params, force_tiled=True, tile_caps={"tk_max": 512}))
    assert y_tiled.shape == (batch, num_out)

    # Reference at matched precision (bf16 operands, f32 accumulate): tight check.
    x2d = x.reshape(batch, -1)
    ref_bf = (x2d.astype(jnp.bfloat16).astype(jnp.float32)
              @ weight.astype(jnp.bfloat16).astype(jnp.float32).T) + bias
    assert jnp.allclose(y, ref_bf, atol=2e-3, rtol=2e-3)
    assert jnp.allclose(y_tiled, ref_bf, atol=2e-3, rtol=2e-3)
    assert jnp.allclose(y, y_tiled, atol=2e-3, rtol=2e-3)

    # Sanity vs full-f32 nn.Linear reference (tolerance sized for bf16 rounding).
    ref_f32 = x2d @ weight.T + bias
    assert jnp.allclose(y, ref_f32, atol=5e-2, rtol=5e-2)

    print("KERNEL_OK")
</pallas_src>

<mosaic_0001>
module attributes {stable_mosaic.version = 11 : i64} {
  func.func @_linear_single_kernel(%arg0: i32, %arg1: memref<16x1024xbf16, #tpu.memory_space<vmem>>, %arg2: memref<1024x128xbf16, #tpu.memory_space<vmem>>, %arg3: memref<1x128xf32, #tpu.memory_space<vmem>>, %arg4: memref<16x128xf32, #tpu.memory_space<vmem>>) attributes {dimension_semantics = [#tpu.dimension_semantics<arbitrary>], iteration_bounds = array<i64: 1>, scalar_prefetch = 0 : i64, scratch_operands = 0 : i64, tpu.core_type = #tpu.core_type<tc>, window_params = [{pipeline_mode = #tpu.pipeline_mode<synchronous>, transform_indices = @transform_0, window_bounds = array<i64: 16, 1024>}, {pipeline_mode = #tpu.pipeline_mode<synchronous>, transform_indices = @transform_1, window_bounds = array<i64: 1024, 128>}, {pipeline_mode = #tpu.pipeline_mode<synchronous>, transform_indices = @transform_2, window_bounds = array<i64: 1, 128>}, {pipeline_mode = #tpu.pipeline_mode<synchronous>, transform_indices = @transform_3, window_bounds = array<i64: 16, 128>}]} {
    %c0 = arith.constant 0 : index
    %c0_0 = arith.constant 0 : index
    %0 = vector.load %arg1[%c0, %c0_0] : memref<16x1024xbf16, #tpu.memory_space<vmem>>, vector<16x1024xbf16>
    %c0_1 = arith.constant 0 : index
    %c0_2 = arith.constant 0 : index
    %1 = vector.load %arg2[%c0_1, %c0_2] : memref<1024x128xbf16, #tpu.memory_space<vmem>>, vector<1024x128xbf16>
    %cst = arith.constant dense<0.000000e+00> : vector<16x128xf32>
    %2 = tpu.matmul %0, %1, %cst {dimension_numbers = #tpu.dot_dimension_numbers<[1], [0], [0], [1], [0, 0, 1, 1], [], []>} : vector<16x1024xbf16>, vector<1024x128xbf16>, vector<16x128xf32> -> vector<16x128xf32>
    %c0_3 = arith.constant 0 : index
    %c0_4 = arith.constant 0 : index
    %3 = vector.load %arg3[%c0_3, %c0_4] : memref<1x128xf32, #tpu.memory_space<vmem>>, vector<1x128xf32>
    %4 = vector.broadcast %3 : vector<1x128xf32> to vector<16x128xf32>
    %5 = arith.addf %2, %4 : vector<16x128xf32>
    %c0_5 = arith.constant 0 : index
    %c0_6 = arith.constant 0 : index
    %6 = vector.load %arg4[%c0_5, %c0_6] : memref<16x128xf32, #tpu.memory_space<vmem>>, vector<16x128xf32>
    tpu.vector_store %arg4[%c0_5, %c0_6], %5 {strides = array<i32>} : memref<16x128xf32, #tpu.memory_space<vmem>>, vector<16x128xf32>,
    return
  }
  func.func @transform_0(%arg0: i32) -> (i32, i32) {
    %c0_i32 = arith.constant 0 : i32
    %c0_i32_0 = arith.constant 0 : i32
    %c0_i32_1 = arith.constant 0 : i32
    return %c0_i32, %c0_i32_0 : i32, i32
  }
  func.func @transform_1(%arg0: i32) -> (i32, i32) {
    %c0_i32 = arith.constant 0 : i32
    %c0_i32_0 = arith.constant 0 : i32
    %c0_i32_1 = arith.constant 0 : i32
    return %c0_i32, %c0_i32_0 : i32, i32
  }
  func.func @transform_2(%arg0: i32) -> (i32, i32) {
    %c0_i32 = arith.constant 0 : i32
    %c0_i32_0 = arith.constant 0 : i32
    %c0_i32_1 = arith.constant 0 : i32
    return %c0_i32, %c0_i32_0 : i32, i32
  }
  func.func @transform_3(%arg0: i32) -> (i32, i32) {
    %c0_i32 = arith.constant 0 : i32
    %c0_i32_0 = arith.constant 0 : i32
    %c0_i32_1 = arith.constant 0 : i32
    return %c0_i32, %c0_i32_0 : i32, i32
  }
}

</mosaic_0001>

<llo_original>
// kernel: tpu_custom_call.1
$region0: #{tpu_custom_call.1}
  #allocation0 [shape = 'u32[]', space=smem, size = 0x4, offset = 0x4, fixed_abs, tag = 'smem constant byte address 0x4 - core index']
  #allocation1 [shape = 'u32[144,128]{1,0:T(1,128)}', space=vmem, size = 0x12000, scoped, tag = 'internal scratch']
  %s0 = inlined_call_operand.hbm [shape: bf16[16,1024], index: 0, kind: input, shape index: {}]
  %s1 = inlined_call_operand.hbm [shape: bf16[1024,128], index: 1, kind: input, shape index: {}]
  %s2 = inlined_call_operand.vmem [shape: f32[1,128], index: 2, kind: input, shape index: {}]
  %s3 = inlined_call_operand.hbm [shape: f32[16,128], index: 3, kind: output, shape index: {}]
  %s4 = sld [smem:[#allocation0]]
  $region30: #{tpu_custom_call.1} parent=0
    _
  %s6 = ssub.s32 1, %s4
  %s7 = scalar_select 0, %s6, %s4
  $region1: #{tpu_custom_call.1} parent=0
    #allocation2 [shape = 'u8[32768]{0}', space=vmem, size = 0x8000, scoped, tag = 'input window, operand 0, single buffered']
    #allocation3 [shape = 's32[1]{0}', space=sflag, size = 0x4, scoped, tag = 'scoped memory for tpu_custom_call.1']
    #allocation4 [shape = 's32[1]{0}', space=sflag, size = 0x4, scoped, tag = 'scoped memory for tpu_custom_call.1']
    #allocation5 [shape = 'u8[262144]{0}', space=vmem, size = 0x40000, scoped, tag = 'input window, operand 1, single buffered']
    #allocation6 [shape = 's32[1]{0}', space=sflag, size = 0x4, scoped, tag = 'scoped memory for tpu_custom_call.1']
    #allocation7 [shape = 'u8[8192]{0}', space=vmem, size = 0x2000, scoped, tag = 'output window, operand 0, single buffered']
    %8 = vsyncpa [#allocation3], 0
    %9 = vsyncpa [#allocation6], 0
    %10 = vsyncpa [#allocation4], 0
    // Predicated region
    $region2: #{tpu_custom_call.1} parent=1 // pred_check
      _
    $region3: #{tpu_custom_call.1} parent=1 // pred_check_branch
      %12 = sbr.rel (0) target = $region5
    $region4: #{tpu_custom_call.1} parent=1 // pred_region
      %s14 = ssub.s32 1024, 1024
      %15 = vsyncadd [#allocation3], %s14
      %s16 = sshll.u32 [#allocation2], 4
      %s17 = int_to_ptr.vmem [resolvable:$true] %s16
      %22 = dma.hbm_to_vmem [thread:$0]  %s0, 1024, %s17, [#allocation3], 512, 512, 32
    $region5: #{tpu_custom_call.1} parent=1 // pred_fallthru
      _
    // Predicated region
    $region6: #{tpu_custom_call.1} parent=1 // pred_check
      _
    $region7: #{tpu_custom_call.1} parent=1 // pred_check_branch
      %24 = sbr.rel (0) target = $region9
    $region8: #{tpu_custom_call.1} parent=1 // pred_region
      %s26 = ssub.s32 8192, 8192
      %27 = vsyncadd [#allocation6], %s26
      %s28 = sshll.u32 [#allocation5], 4
      %s29 = int_to_ptr.vmem [resolvable:$true] %s28
      %34 = dma.hbm_to_vmem [thread:$0]  %s1, 8192, %s29, [#allocation6], 64, 64, 4
    $region9: #{tpu_custom_call.1} parent=1 // pred_fallthru
      _
    // Predicated region
    $region10: #{tpu_custom_call.1} parent=1 // pred_check
      _
    $region11: #{tpu_custom_call.1} parent=1 // pred_check_branch
      %36 = sbr.rel (0) target = $region13
    $region12: #{tpu_custom_call.1} parent=1 // pred_region
      _
    $region13: #{tpu_custom_call.1} parent=1 // pred_fallthru
      _
    // Predicated region
    $region14: #{tpu_custom_call.1} parent=1 // pred_check
      _
    $region15: #{tpu_custom_call.1} parent=1 // pred_check_branch
      %38 = sbr.rel (0) target = $region17
    $region16: #{tpu_custom_call.1} parent=1 // pred_region
      %39 = dma.done [#allocation3], 1024
    $region17: #{tpu_custom_call.1} parent=1 // pred_fallthru
      _
    // Predicated region
    $region18: #{tpu_custom_call.1} parent=1 // pred_check
      _
    $region19: #{tpu_custom_call.1} parent=1 // pred_check_branch
      %41 = sbr.rel (0) target = $region21
    $region20: #{tpu_custom_call.1} parent=1 // pred_region
      %42 = dma.done [#allocation6], 8192
    $region21: #{tpu_custom_call.1} parent=1 // pred_fallthru
      _
    %v44 = vld [vmem:[#allocation2] sm:$0xff]
    %v45 = vld [vmem:[#allocation2 + $0x8] sm:$0xff]
    %v46 = vld [vmem:[#allocation2 + $0x10] sm:$0xff]
    %v47 = vld [vmem:[#allocation2 + $0x18] sm:$0xff]
    %v48 = vld [vmem:[#allocation2 + $0x20] sm:$0xff]
    %v49 = vld [vmem:[#allocation2 + $0x28] sm:$0xff]
    %v50 = vld [vmem:[#allocation2 + $0x30] sm:$0xff]
    %v51 = vld [vmem:[#allocation2 + $0x38] sm:$0xff]
    %v52 = vld [vmem:[#allocation5] sm:$0xf]
    %v53 = vld [vmem:[#allocation5 + $0x4] sm:$0xf]
    %v54 = vld [vmem:[#allocation5 + $0x8] sm:$0xf]
    %v55 = vld [vmem:[#allocation5 + $0xc] sm:$0xf]
    %v56 = vld [vmem:[#allocation5 + $0x10] sm:$0xf]
    %v57 = vld [vmem:[#allocation5 + $0x14] sm:$0xf]
    %v58 = vld [vmem:[#allocation5 + $0x18] sm:$0xf]
    %v59 = vld [vmem:[#allocation5 + $0x1c] sm:$0xf]
    %v60 = vld [vmem:[#allocation5 + $0x20] sm:$0xf]
    %v61 = vld [vmem:[#allocation5 + $0x24] sm:$0xf]
    %v62 = vld [vmem:[#allocation5 + $0x28] sm:$0xf]
    %v63 = vld [vmem:[#allocation5 + $0x2c] sm:$0xf]
    %v64 = vld [vmem:[#allocation5 + $0x30] sm:$0xf]
    %v65 = vld [vmem:[#allocation5 + $0x34] sm:$0xf]
    %v66 = vld [vmem:[#allocation5 + $0x38] sm:$0xf]
    %v67 = vld [vmem:[#allocation5 + $0x3c] sm:$0xf]
    %v68 = vld [vmem:[#allocation5 + $0x40] sm:$0xf]
    %v69 = vld [vmem:[#allocation5 + $0x44] sm:$0xf]
    %v70 = vld [vmem:[#allocation5 + $0x48] sm:$0xf]
    %v71 = vld [vmem:[#allocation5 + $0x4c] sm:$0xf]
    %v72 = vld [vmem:[#allocation5 + $0x50] sm:$0xf]
    %v73 = vld [vmem:[#allocation5 + $0x54] sm:$0xf]
    %v74 = vld [vmem:[#allocation5 + $0x58] sm:$0xf]
    %v75 = vld [vmem:[#allocation5 + $0x5c] sm:$0xf]
    %v76 = vld [vmem:[#allocation5 + $0x60] sm:$0xf]
    %v77 = vld [vmem:[#allocation5 + $0x64] sm:$0xf]
    %v78 = vld [vmem:[#allocation5 + $0x68] sm:$0xf]
    %v79 = vld [vmem:[#allocation5 + $0x6c] sm:$0xf]
    %v80 = vld [vmem:[#allocation5 + $0x70] sm:$0xf]
    %v81 = vld [vmem:[#allocation5 + $0x74] sm:$0xf]
    %v82 = vld [vmem:[#allocation5 + $0x78] sm:$0xf]
    %v83 = vld [vmem:[#allocation5 + $0x7c] sm:$0xf]
    %v84 = vld [vmem:[#allocation5 + $0x80] sm:$0xf]
    %v85 = vld [vmem:[#allocation5 + $0x84] sm:$0xf]
    %v86 = vld [vmem:[#allocation5 + $0x88] sm:$0xf]
    %v87 = vld [vmem:[#allocation5 + $0x8c] sm:$0xf]
    %v88 = vld [vmem:[#allocation5 + $0x90] sm:$0xf]
    %v89 = vld [vmem:[#allocation5 + $0x94] sm:$0xf]
    %v90 = vld [vmem:[#allocation5 + $0x98] sm:$0xf]
    %v91 = vld [vmem:[#allocation5 + $0x9c] sm:$0xf]
    %v92 = vld [vmem:[#allocation5 + $0xa0] sm:$0xf]
    %v93 = vld [vmem:[#allocation5 + $0xa4] sm:$0xf]
    %v94 = vld [vmem:[#allocation5 + $0xa8] sm:$0xf]
    %v95 = vld [vmem:[#allocation5 + $0xac] sm:$0xf]
    %v96 = vld [vmem:[#allocation5 + $0xb0] sm:$0xf]
    %v97 = vld [vmem:[#allocation5 + $0xb4] sm:$0xf]
    %v98 = vld [vmem:[#allocation5 + $0xb8] sm:$0xf]
    %v99 = vld [vmem:[#allocation5 + $0xbc] sm:$0xf]
    %v100 = vld [vmem:[#allocation5 + $0xc0] sm:$0xf]
    %v101 = vld [vmem:[#allocation5 + $0xc4] sm:$0xf]
    %v102 = vld [vmem:[#allocation5 + $0xc8] sm:$0xf]
    %v103 = vld [vmem:[#allocation5 + $0xcc] sm:$0xf]
    %v104 = vld [vmem:[#allocation5 + $0xd0] sm:$0xf]
    %v105 = vld [vmem:[#allocation5 + $0xd4] sm:$0xf]
    %v106 = vld [vmem:[#allocation5 + $0xd8] sm:$0xf]
    %v107 = vld [vmem:[#allocation5 + $0xdc] sm:$0xf]
    %v108 = vld [vmem:[#allocation5 + $0xe0] sm:$0xf]
    %v109 = vld [vmem:[#allocation5 + $0xe4] sm:$0xf]
    %v110 = vld [vmem:[#allocation5 + $0xe8] sm:$0xf]
    %v111 = vld [vmem:[#allocation5 + $0xec] sm:$0xf]
    %v112 = vld [vmem:[#allocation5 + $0xf0] sm:$0xf]
    %v113 = vld [vmem:[#allocation5 + $0xf4] sm:$0xf]
    %v114 = vld [vmem:[#allocation5 + $0xf8] sm:$0xf]
    %v115 = vld [vmem:[#allocation5 + $0xfc] sm:$0xf]
    %v116 = vld [vmem:[#allocation5 + $0x100] sm:$0xf]
    %v117 = vld [vmem:[#allocation5 + $0x104] sm:$0xf]
    %v118 = vld [vmem:[#allocation5 + $0x108] sm:$0xf]
    %v119 = vld [vmem:[#allocation5 + $0x10c] sm:$0xf]
    %v120 = vld [vmem:[#allocation5 + $0x110] sm:$0xf]
    %v121 = vld [vmem:[#allocation5 + $0x114] sm:$0xf]
    %v122 = vld [vmem:[#allocation5 + $0x118] sm:$0xf]
    %v123 = vld [vmem:[#allocation5 + $0x11c] sm:$0xf]
    %v124 = vld [vmem:[#allocation5 + $0x120] sm:$0xf]
    %v125 = vld [vmem:[#allocation5 + $0x124] sm:$0xf]
    %v126 = vld [vmem:[#allocation5 + $0x128] sm:$0xf]
    %v127 = vld [vmem:[#allocation5 + $0x12c] sm:$0xf]
    %v128 = vld [vmem:[#allocation5 + $0x130] sm:$0xf]
    %v129 = vld [vmem:[#allocation5 + $0x134] sm:$0xf]
    %v130 = vld [vmem:[#allocation5 + $0x138] sm:$0xf]
    %v131 = vld [vmem:[#allocation5 + $0x13c] sm:$0xf]
    %v132 = vld [vmem:[#allocation5 + $0x140] sm:$0xf]
    %v133 = vld [vmem:[#allocation5 + $0x144] sm:$0xf]
    %v134 = vld [vmem:[#allocation5 + $0x148] sm:$0xf]
    %v135 = vld [vmem:[#allocation5 + $0x14c] sm:$0xf]
    %v136 = vld [vmem:[#allocation5 + $0x150] sm:$0xf]
    %v137 = vld [vmem:[#allocation5 + $0x154] sm:$0xf]
    %v138 = vld [vmem:[#allocation5 + $0x158] sm:$0xf]
    %v139 = vld [vmem:[#allocation5 + $0x15c] sm:$0xf]
    %v140 = vld [vmem:[#allocation5 + $0x160] sm:$0xf]
    %v141 = vld [vmem:[#allocation5 + $0x164] sm:$0xf]
    %v142 = vld [vmem:[#allocation5 + $0x168] sm:$0xf]
    %v143 = vld [vmem:[#allocation5 + $0x16c] sm:$0xf]
    %v144 = vld [vmem:[#allocation5 + $0x170] sm:$0xf]
    %v145 = vld [vmem:[#allocation5 + $0x174] sm:$0xf]
    %v146 = vld [vmem:[#allocation5 + $0x178] sm:$0xf]
    %v147 = vld [vmem:[#allocation5 + $0x17c] sm:$0xf]
    %v148 = vld [vmem:[#allocation5 + $0x180] sm:$0xf]
    %v149 = vld [vmem:[#allocation5 + $0x184] sm:$0xf]
    %v150 = vld [vmem:[#allocation5 + $0x188] sm:$0xf]
    %v151 = vld [vmem:[#allocation5 + $0x18c] sm:$0xf]
    %v152 = vld [vmem:[#allocation5 + $0x190] sm:$0xf]
    %v153 = vld [vmem:[#allocation5 + $0x194] sm:$0xf]
    %v154 = vld [vmem:[#allocation5 + $0x198] sm:$0xf]
    %v155 = vld [vmem:[#allocation5 + $0x19c] sm:$0xf]
    %v156 = vld [vmem:[#allocation5 + $0x1a0] sm:$0xf]
    %v157 = vld [vmem:[#allocation5 + $0x1a4] sm:$0xf]
    %v158 = vld [vmem:[#allocation5 + $0x1a8] sm:$0xf]
    %v159 = vld [vmem:[#allocation5 + $0x1ac] sm:$0xf]
    %v160 = vld [vmem:[#allocation5 + $0x1b0] sm:$0xf]
    %v161 = vld [vmem:[#allocation5 + $0x1b4] sm:$0xf]
    %v162 = vld [vmem:[#allocation5 + $0x1b8] sm:$0xf]
    %v163 = vld [vmem:[#allocation5 + $0x1bc] sm:$0xf]
    %v164 = vld [vmem:[#allocation5 + $0x1c0] sm:$0xf]
    %v165 = vld [vmem:[#allocation5 + $0x1c4] sm:$0xf]
    %v166 = vld [vmem:[#allocation5 + $0x1c8] sm:$0xf]
    %v167 = vld [vmem:[#allocation5 + $0x1cc] sm:$0xf]
    %v168 = vld [vmem:[#allocation5 + $0x1d0] sm:$0xf]
    %v169 = vld [vmem:[#allocation5 + $0x1d4] sm:$0xf]
    %v170 = vld [vmem:[#allocation5 + $0x1d8] sm:$0xf]
    %v171 = vld [vmem:[#allocation5 + $0x1dc] sm:$0xf]
    %v172 = vld [vmem:[#allocation5 + $0x1e0] sm:$0xf]
    %v173 = vld [vmem:[#allocation5 + $0x1e4] sm:$0xf]
    %v174 = vld [vmem:[#allocation5 + $0x1e8] sm:$0xf]
    %v175 = vld [vmem:[#allocation5 + $0x1ec] sm:$0xf]
    %v176 = vld [vmem:[#allocation5 + $0x1f0] sm:$0xf]
    %v177 = vld [vmem:[#allocation5 + $0x1f4] sm:$0xf]
    %v178 = vld [vmem:[#allocation5 + $0x1f8] sm:$0xf]
    %v179 = vld [vmem:[#allocation5 + $0x1fc] sm:$0xf]
    %v180 = vld [vmem:[%s2] sm:$0x1]
    %v182 = vlaneseq
    %v183 = vshrl.u32 %v182, 7
    %v184 = vsub.s32 0, %v183
    %v185 = vrot.slane %v180, %v184
    %v195 = vunpack.c.l.b16 %v44
    %v196 = vunpack.c.h.b16 %v44
    %v197 = vunpack.c.l.b16 %v45
    %v198 = vunpack.c.h.b16 %v45
    %v199 = vunpack.c.l.b16 %v46
    %v200 = vunpack.c.h.b16 %v46
    %v201 = vunpack.c.l.b16 %v47
    %v202 = vunpack.c.h.b16 %v47
    %v203 = vunpack.c.l.b16 %v48
    %v204 = vunpack.c.h.b16 %v48
    %v205 = vunpack.c.l.b16 %v49
    %v206 = vunpack.c.h.b16 %v49
    %v207 = vunpack.c.l.b16 %v50
    %v208 = vunpack.c.h.b16 %v50
    %v209 = vunpack.c.l.b16 %v51
    %v210 = vunpack.c.h.b16 %v51
    %v211 = vpack.c.b16 %v203, %v195
    %v212 = vpack.c.b16 %v204, %v196
    %v213 = vpack.c.b16 %v205, %v197
    %v214 = vpack.c.b16 %v206, %v198
    %v215 = vpack.c.b16 %v207, %v199
    %v216 = vpack.c.b16 %v208, %v200
    %v217 = vpack.c.b16 %v209, %v201
    %v218 = vpack.c.b16 %v210, %v202
    %v355 = vunpack.c.l.b16 %v52
    %v356 = vunpack.c.l.b16 %v53
    %v357 = vunpack.c.l.b16 %v54
    %v358 = vunpack.c.l.b16 %v55
    %v359 = vunpack.c.l.b16 %v56
    %v360 = vunpack.c.l.b16 %v57
    %v361 = vunpack.c.l.b16 %v58
    %v362 = vunpack.c.l.b16 %v59
    %v363 = vunpack.c.l.b16 %v60
    %v364 = vunpack.c.l.b16 %v61
    %v365 = vunpack.c.l.b16 %v62
    %v366 = vunpack.c.l.b16 %v63
    %v367 = vunpack.c.l.b16 %v64
    %v368 = vunpack.c.l.b16 %v65
    %v369 = vunpack.c.l.b16 %v66
    %v370 = vunpack.c.l.b16 %v67
    %v371 = vunpack.c.l.b16 %v68
    %v372 = vunpack.c.l.b16 %v69
    %v373 = vunpack.c.l.b16 %v70
    %v374 = vunpack.c.l.b16 %v71
    %v375 = vunpack.c.l.b16 %v72
    %v376 = vunpack.c.l.b16 %v73
    %v377 = vunpack.c.l.b16 %v74
    %v378 = vunpack.c.l.b16 %v75
    %v379 = vunpack.c.l.b16 %v76
    %v380 = vunpack.c.l.b16 %v77
    %v381 = vunpack.c.l.b16 %v78
    %v382 = vunpack.c.l.b16 %v79
    %v383 = vunpack.c.l.b16 %v80
    %v384 = vunpack.c.l.b16 %v81
    %v385 = vunpack.c.l.b16 %v82
    %v386 = vunpack.c.l.b16 %v83
    %v387 = vunpack.c.l.b16 %v84
    %v388 = vunpack.c.l.b16 %v85
    %v389 = vunpack.c.l.b16 %v86
    %v390 = vunpack.c.l.b16 %v87
    %v391 = vunpack.c.l.b16 %v88
    %v392 = vunpack.c.l.b16 %v89
    %v393 = vunpack.c.l.b16 %v90
    %v394 = vunpack.c.l.b16 %v91
    %v395 = vunpack.c.l.b16 %v92
    %v396 = vunpack.c.l.b16 %v93
    %v397 = vunpack.c.l.b16 %v94
    %v398 = vunpack.c.l.b16 %v95
    %v399 = vunpack.c.l.b16 %v96
    %v400 = vunpack.c.l.b16 %v97
    %v401 = vunpack.c.l.b16 %v98
    %v402 = vunpack.c.l.b16 %v99
    %v403 = vunpack.c.l.b16 %v100
    %v404 = vunpack.c.l.b16 %v101
    %v405 = vunpack.c.l.b16 %v102
    %v406 = vunpack.c.l.b16 %v103
    %v407 = vunpack.c.l.b16 %v104
    %v408 = vunpack.c.l.b16 %v105
    %v409 = vunpack.c.l.b16 %v106
    %v410 = vunpack.c.l.b16 %v107
    %v411 = vunpack.c.l.b16 %v108
    %v412 = vunpack.c.l.b16 %v109
    %v413 = vunpack.c.l.b16 %v110
    %v414 = vunpack.c.l.b16 %v111
    %v415 = vunpack.c.l.b16 %v112
    %v416 = vunpack.c.l.b16 %v113
    %v417 = vunpack.c.l.b16 %v114
    %v418 = vunpack.c.l.b16 %v115
    %v419 = vunpack.c.l.b16 %v116
    %v420 = vunpack.c.l.b16 %v117
    %v421 = vunpack.c.l.b16 %v118
    %v422 = vunpack.c.l.b16 %v119
    %v423 = vunpack.c.l.b16 %v120
    %v424 = vunpack.c.l.b16 %v121
    %v425 = vunpack.c.l.b16 %v122
    %v426 = vunpack.c.l.b16 %v123
    %v427 = vunpack.c.l.b16 %v124
    %v428 = vunpack.c.l.b16 %v125
    %v429 = vunpack.c.l.b16 %v126
    %v430 = vunpack.c.l.b16 %v127
    %v431 = vunpack.c.l.b16 %v128
    %v432 = vunpack.c.l.b16 %v129
    %v433 = vunpack.c.l.b16 %v130
    %v434 = vunpack.c.l.b16 %v131
    %v435 = vunpack.c.l.b16 %v132
    %v436 = vunpack.c.l.b16 %v133
    %v437 = vunpack.c.l.b16 %v134
    %v438 = vunpack.c.l.b16 %v135
    %v439 = vunpack.c.l.b16 %v136
    %v440 = vunpack.c.l.b16 %v137
    %v441 = vunpack.c.l.b16 %v138
    %v442 = vunpack.c.l.b16 %v139
    %v443 = vunpack.c.l.b16 %v140
    %v444 = vunpack.c.l.b16 %v141
    %v445 = vunpack.c.l.b16 %v142
    %v446 = vunpack.c.l.b16 %v143
    %v447 = vunpack.c.l.b16 %v144
    %v448 = vunpack.c.l.b16 %v145
    %v449 = vunpack.c.l.b16 %v146
    %v450 = vunpack.c.l.b16 %v147
    %v451 = vunpack.c.l.b16 %v148
    %v452 = vunpack.c.l.b16 %v149
    %v453 = vunpack.c.l.b16 %v150
    %v454 = vunpack.c.l.b16 %v151
    %v455 = vunpack.c.l.b16 %v152
    %v456 = vunpack.c.l.b16 %v153
    %v457 = vunpack.c.l.b16 %v154
    %v458 = vunpack.c.l.b16 %v155
    %v459 = vunpack.c.l.b16 %v156
    %v460 = vunpack.c.l.b16 %v157
    %v461 = vunpack.c.l.b16 %v158
    %v462 = vunpack.c.l.b16 %v159
    %v463 = vunpack.c.l.b16 %v160
    %v464 = vunpack.c.l.b16 %v161
    %v465 = vunpack.c.l.b16 %v162
    %v466 = vunpack.c.l.b16 %v163
    %v467 = vunpack.c.l.b16 %v164
    %v468 = vunpack.c.l.b16 %v165
    %v469 = vunpack.c.l.b16 %v166
    %v470 = vunpack.c.l.b16 %v167
    %v471 = vunpack.c.l.b16 %v168
    %v472 = vunpack.c.l.b16 %v169
    %v473 = vunpack.c.l.b16 %v170
    %v474 = vunpack.c.l.b16 %v171
    %v475 = vunpack.c.l.b16 %v172
    %v476 = vunpack.c.l.b16 %v173
    %v477 = vunpack.c.l.b16 %v174
    %v478 = vunpack.c.l.b16 %v175
    %v479 = vunpack.c.l.b16 %v176
    %v480 = vunpack.c.l.b16 %v177
    %v481 = vunpack.c.l.b16 %v178
    %v482 = vunpack.c.l.b16 %v179
    %v483 = vpack.c.b16 %v356, %v355
    %v484 = vpack.c.b16 %v358, %v357
    %v485 = vpack.c.b16 %v360, %v359
    %v486 = vpack.c.b16 %v362, %v361
    %v487 = vpack.c.b16 %v364, %v363
    %v488 = vpack.c.b16 %v366, %v365
    %v489 = vpack.c.b16 %v368, %v367
    %v490 = vpack.c.b16 %v370, %v369
    %v491 = vpack.c.b16 %v372, %v371
    %v492 = vpack.c.b16 %v374, %v373
    %v493 = vpack.c.b16 %v376, %v375
    %v494 = vpack.c.b16 %v378, %v377
    %v495 = vpack.c.b16 %v380, %v379
    %v496 = vpack.c.b16 %v382, %v381
    %v497 = vpack.c.b16 %v384, %v383
    %v498 = vpack.c.b16 %v386, %v385
    %v499 = vpack.c.b16 %v388, %v387
    %v500 = vpack.c.b16 %v390, %v389
    %v501 = vpack.c.b16 %v392, %v391
    %v502 = vpack.c.b16 %v394, %v393
    %v503 = vpack.c.b16 %v396, %v395
    %v504 = vpack.c.b16 %v398, %v397
    %v505 = vpack.c.b16 %v400, %v399
    %v506 = vpack.c.b16 %v402, %v401
    %v507 = vpack.c.b16 %v404, %v403
    %v508 = vpack.c.b16 %v406, %v405
    %v509 = vpack.c.b16 %v408, %v407
    %v510 = vpack.c.b16 %v410, %v409
    %v511 = vpack.c.b16 %v412, %v411
    %v512 = vpack.c.b16 %v414, %v413
    %v513 = vpack.c.b16 %v416, %v415
    %v514 = vpack.c.b16 %v418, %v417
    %v515 = vpack.c.b16 %v420, %v419
    %v516 = vpack.c.b16 %v422, %v421
    %v517 = vpack.c.b16 %v424, %v423
    %v518 = vpack.c.b16 %v426, %v425
    %v519 = vpack.c.b16 %v428, %v427
    %v520 = vpack.c.b16 %v430, %v429
    %v521 = vpack.c.b16 %v432, %v431
    %v522 = vpack.c.b16 %v434, %v433
    %v523 = vpack.c.b16 %v436, %v435
    %v524 = vpack.c.b16 %v438, %v437
    %v525 = vpack.c.b16 %v440, %v439
    %v526 = vpack.c.b16 %v442, %v441
    %v527 = vpack.c.b16 %v444, %v443
    %v528 = vpack.c.b16 %v446, %v445
    %v529 = vpack.c.b16 %v448, %v447
    %v530 = vpack.c.b16 %v450, %v449
    %v531 = vpack.c.b16 %v452, %v451
    %v532 = vpack.c.b16 %v454, %v453
    %v533 = vpack.c.b16 %v456, %v455
    %v534 = vpack.c.b16 %v458, %v457
    %v535 = vpack.c.b16 %v460, %v459
    %v536 = vpack.c.b16 %v462, %v461
    %v537 = vpack.c.b16 %v464, %v463
    %v538 = vpack.c.b16 %v466, %v465
    %v539 = vpack.c.b16 %v468, %v467
    %v540 = vpack.c.b16 %v470, %v469
    %v541 = vpack.c.b16 %v472, %v471
    %v542 = vpack.c.b16 %v474, %v473
    %v543 = vpack.c.b16 %v476, %v475
    %v544 = vpack.c.b16 %v478, %v477
    %v545 = vpack.c.b16 %v480, %v479
    %v546 = vpack.c.b16 %v482, %v481
    %611 = vmatprep.subr.bf16.mxu0 0
    %612 = vmatpush1.bf16.msra.mxu0 %v490
    %613 = vmatprep.subr.bf16.mxu0 0
    %614 = vmatpush1.bf16.msra.mxu0 %v489
    %615 = vmatprep.subr.bf16.mxu0 0
    %616 = vmatpush1.bf16.msra.mxu0 %v488
    %617 = vmatprep.subr.bf16.mxu0 0
    %618 = vmatpush1.bf16.msra.mxu0 %v487
    %619 = vmatprep.subr.bf16.mxu0 0
    %620 = vmatpush1.bf16.msra.mxu0 %v486
    %621 = vmatprep.subr.bf16.mxu0 0
    %622 = vmatpush1.bf16.msra.mxu0 %v485
    %623 = vmatprep.subr.bf16.mxu0 0
    %624 = vmatpush1.bf16.msra.mxu0 %v484
    %625 = vmatprep.subr.bf16.mxu0 0
    %626 = vmatpush1.bf16.msra.mxu0 %v483
    %627 = vmatprep.subr.bf16.mxu0 0
    %628 = vmatpush2.bf16.msra.mxu0 %v498
    %629 = vmatprep.subr.bf16.mxu0 0
    %630 = vmatpush2.bf16.msra.mxu0 %v497
    %631 = vmatprep.subr.bf16.mxu0 0
    %632 = vmatpush2.bf16.msra.mxu0 %v496
    %633 = vmatprep.subr.bf16.mxu0 0
    %634 = vmatpush2.bf16.msra.mxu0 %v495
    %635 = vmatprep.subr.bf16.mxu0 0
    %636 = vmatpush2.bf16.msra.mxu0 %v494
    %637 = vmatprep.subr.bf16.mxu0 0
    %638 = vmatpush2.bf16.msra.mxu0 %v493
    %639 = vmatprep.subr.bf16.mxu0 0
    %640 = vmatpush2.bf16.msra.mxu0 %v492
    %641 = vmatprep.subr.bf16.mxu0 0
    %642 = vmatpush2.bf16.msra.mxu0 %v491
    %643 = vmatprep.mubr.bf16.mxu0 %v212
    %644 = vmatmul.mubr.bf16.gmra.mxu0 %v211
    %v645 = vpop.f32.mrf.mxu0
    %v646 = vadd.f32 %v185, %v645
    %v647 = vpop.f32.mrf.mxu0
    %v648 = vpop.f32.mrf.mxu0
    %v649 = vadd.f32 %v185, %v648
    %v650 = vpop.f32.mrf.mxu0
    %651 = vdwg.mxu0
    %652 = vmatprep.subr.bf16.mxu0 0
    %653 = vmatpush1.bf16.msra.mxu0 %v506
    %654 = vmatprep.subr.bf16.mxu0 0
    %655 = vmatpush1.bf16.msra.mxu0 %v505
    %656 = vmatprep.subr.bf16.mxu0 0
    %657 = vmatpush1.bf16.msra.mxu0 %v504
    %658 = vmatprep.subr.bf16.mxu0 0
    %659 = vmatpush1.bf16.msra.mxu0 %v503
    %660 = vmatprep.subr.bf16.mxu0 0
    %661 = vmatpush1.bf16.msra.mxu0 %v502
    %662 = vmatprep.subr.bf16.mxu0 0
    %663 = vmatpush1.bf16.msra.mxu0 %v501
    %664 = vmatprep.subr.bf16.mxu0 0
    %665 = vmatpush1.bf16.msra.mxu0 %v500
    %666 = vmatprep.subr.bf16.mxu0 0
    %667 = vmatpush1.bf16.msra.mxu0 %v499
    %668 = vmatprep.subr.bf16.mxu0 0
    %669 = vmatpush2.bf16.msra.mxu0 %v514
    %670 = vmatprep.subr.bf16.mxu0 0
    %671 = vmatpush2.bf16.msra.mxu0 %v513
    %672 = vmatprep.subr.bf16.mxu0 0
    %673 = vmatpush2.bf16.msra.mxu0 %v512
    %674 = vmatprep.subr.bf16.mxu0 0
    %675 = vmatpush2.bf16.msra.mxu0 %v511
    %676 = vmatprep.subr.bf16.mxu0 0
    %677 = vmatpush2.bf16.msra.mxu0 %v510
    %678 = vmatprep.subr.bf16.mxu0 0
    %679 = vmatpush2.bf16.msra.mxu0 %v509
    %680 = vmatprep.subr.bf16.mxu0 0
    %681 = vmatpush2.bf16.msra.mxu0 %v508
    %682 = vmatprep.subr.bf16.mxu0 0
    %683 = vmatpush2.bf16.msra.mxu0 %v507
    %684 = vmatprep.mubr.bf16.mxu0 %v214
    %685 = vmatmul.mubr.bf16.gmra.mxu0 %v213
    %v686 = vpop.f32.mrf.mxu0
    %v687 = vadd.f32 %v646, %v686
    %v688 = vpop.f32.mrf.mxu0
    %v689 = vpop.f32.mrf.mxu0
    %v690 = vadd.f32 %v649, %v689
    %v691 = vpop.f32.mrf.mxu0
    %692 = vdwg.mxu0
    %693 = vmatprep.subr.bf16.mxu0 0
    %694 = vmatpush1.bf16.msra.mxu0 %v522
    %695 = vmatprep.subr.bf16.mxu0 0
    %696 = vmatpush1.bf16.msra.mxu0 %v521
    %697 = vmatprep.subr.bf16.mxu0 0
    %698 = vmatpush1.bf16.msra.mxu0 %v520
    %699 = vmatprep.subr.bf16.mxu0 0
    %700 = vmatpush1.bf16.msra.mxu0 %v519
    %701 = vmatprep.subr.bf16.mxu0 0
    %702 = vmatpush1.bf16.msra.mxu0 %v518
    %703 = vmatprep.subr.bf16.mxu0 0
    %704 = vmatpush1.bf16.msra.mxu0 %v517
    %705 = vmatprep.subr.bf16.mxu0 0
    %706 = vmatpush1.bf16.msra.mxu0 %v516
    %707 = vmatprep.subr.bf16.mxu0 0
    %708 = vmatpush1.bf16.msra.mxu0 %v515
    %709 = vmatprep.subr.bf16.mxu0 0
    %710 = vmatpush2.bf16.msra.mxu0 %v530
    %711 = vmatprep.subr.bf16.mxu0 0
    %712 = vmatpush2.bf16.msra.mxu0 %v529
    %713 = vmatprep.subr.bf16.mxu0 0
    %714 = vmatpush2.bf16.msra.mxu0 %v528
    %715 = vmatprep.subr.bf16.mxu0 0
    %716 = vmatpush2.bf16.msra.mxu0 %v527
    %717 = vmatprep.subr.bf16.mxu0 0
    %718 = vmatpush2.bf16.msra.mxu0 %v526
    %719 = vmatprep.subr.bf16.mxu0 0
    %720 = vmatpush2.bf16.msra.mxu0 %v525
    %721 = vmatprep.subr.bf16.mxu0 0
    %722 = vmatpush2.bf16.msra.mxu0 %v524
    %723 = vmatprep.subr.bf16.mxu0 0
    %724 = vmatpush2.bf16.msra.mxu0 %v523
    %725 = vmatprep.mubr.bf16.mxu0 %v216
    %726 = vmatmul.mubr.bf16.gmra.mxu0 %v215
    %v727 = vpop.f32.mrf.mxu0
    %v728 = vadd.f32 %v687, %v727
    %v729 = vpop.f32.mrf.mxu0
    %v730 = vpop.f32.mrf.mxu0
    %v731 = vadd.f32 %v690, %v730
    %v732 = vpop.f32.mrf.mxu0
    %733 = vdwg.mxu0
    %734 = vmatprep.subr.bf16.mxu0 0
    %735 = vmatpush1.bf16.msra.mxu0 %v538
    %736 = vmatprep.subr.bf16.mxu0 0
    %737 = vmatpush1.bf16.msra.mxu0 %v537
    %738 = vmatprep.subr.bf16.mxu0 0
    %739 = vmatpush1.bf16.msra.mxu0 %v536
    %740 = vmatprep.subr.bf16.mxu0 0
    %741 = vmatpush1.bf16.msra.mxu0 %v535
    %742 = vmatprep.subr.bf16.mxu0 0
    %743 = vmatpush1.bf16.msra.mxu0 %v534
    %744 = vmatprep.subr.bf16.mxu0 0
    %745 = vmatpush1.bf16.msra.mxu0 %v533
    %746 = vmatprep.subr.bf16.mxu0 0
    %747 = vmatpush1.bf16.msra.mxu0 %v532
    %748 = vmatprep.subr.bf16.mxu0 0
    %749 = vmatpush1.bf16.msra.mxu0 %v531
    %750 = vmatprep.subr.bf16.mxu0 0
    %751 = vmatpush2.bf16.msra.mxu0 %v546
    %752 = vmatprep.subr.bf16.mxu0 0
    %753 = vmatpush2.bf16.msra.mxu0 %v545
    %754 = vmatprep.subr.bf16.mxu0 0
    %755 = vmatpush2.bf16.msra.mxu0 %v544
    %756 = vmatprep.subr.bf16.mxu0 0
    %757 = vmatpush2.bf16.msra.mxu0 %v543
    %758 = vmatprep.subr.bf16.mxu0 0
    %759 = vmatpush2.bf16.msra.mxu0 %v542
    %760 = vmatprep.subr.bf16.mxu0 0
    %761 = vmatpush2.bf16.msra.mxu0 %v541
    %762 = vmatprep.subr.bf16.mxu0 0
    %763 = vmatpush2.bf16.msra.mxu0 %v540
    %764 = vmatprep.subr.bf16.mxu0 0
    %765 = vmatpush2.bf16.msra.mxu0 %v539
    %766 = vmatprep.mubr.bf16.mxu0 %v218
    %767 = vmatmul.mubr.bf16.gmra.mxu0 %v217
    %v768 = vpop.f32.mrf.mxu0
    %v769 = vadd.f32 %v728, %v768
    %v770 = vpop.f32.mrf.mxu0
    %v771 = vpop.f32.mrf.mxu0
    %v772 = vadd.f32 %v731, %v771
    %v773 = vpop.f32.mrf.mxu0
    %774 = vdwg.mxu0
    %775 = vst [vmem:[#allocation7] sm:$0xff] %v769
    %776 = vst [vmem:[#allocation7 + $0x8] sm:$0xff] %v772
    // Predicated region
    $region22: #{tpu_custom_call.1} parent=1 // pred_check
      _
    $region23: #{tpu_custom_call.1} parent=1 // pred_check_branch
      %778 = sbr.rel (0) target = $region25
    $region24: #{tpu_custom_call.1} parent=1 // pred_region
      %s780 = ssub.s32 256, 256
      %781 = vsyncadd [#allocation4], %s780
      %s782 = sshll.u32 [#allocation7], 4
      %s783 = int_to_ptr.vmem [resolvable:$true] %s782
      %788 = dma.vmem_to_hbm [thread:$0]  %s783, 256, %s3, [#allocation4], 128, 128, 8
    $region25: #{tpu_custom_call.1} parent=1 // pred_fallthru
      _
    // Predicated region
    $region26: #{tpu_custom_call.1} parent=1 // pred_check
      _
    $region27: #{tpu_custom_call.1} parent=1 // pred_check_branch
      %790 = sbr.rel (0) target = $region29
    $region28: #{tpu_custom_call.1} parent=1 // pred_region
      %791 = dma.done [#allocation4], 256
    $region29: #{tpu_custom_call.1} parent=1 // pred_fallthru
      _
    %792 = vsyncpa [#allocation3], 1
    %793 = vsyncpa [#allocation6], 1
    %794 = vsyncpa [#allocation4], 1

</llo_original>
